<compile_context>
chip_gen: v7x
topology: tpu7x:2x2x1
jax: 0.10.0
libtpu: 0.0.40
codegen_flags: <defaults>
</compile_context>

<pallas_src>
import functools

import jax
import jax.numpy as jnp
from jax.experimental import pallas as pl
from jax.experimental.pallas import tpu as pltpu


_LANE = 128


def _round_up(x, m):
    return (x + m - 1) // m * m


def _cdiv(a, b):
    return (a + b - 1) // b


def _vmem_capacity_bytes():
    """Best-effort per-core VMEM capacity query with a conservative fallback."""
    try:
        info = pltpu.get_tpu_info()
        for attr in ("vmem_capacity_bytes", "vmem_bytes", "vmem_size_bytes"):
            v = getattr(info, attr, None)
            if v:
                return int(v)
    except Exception:
        pass
    return 64 * 1024 * 1024  # v7x physical VMEM; safe lower bound everywhere


def _ss_loss_kernel(pred_ref, targ_ref, loss_ref,
                    pt_ref, p_ref, t_ref,
                    *, smooth, sens_w, spec_w, s_valid, ts, mask_tail):
    k = pl.program_id(1)

    @pl.when(k == 0)
    def _():
        pt_ref[...] = jnp.zeros_like(pt_ref)
        p_ref[...] = jnp.zeros_like(p_ref)
        t_ref[...] = jnp.zeros_like(t_ref)

    # Hot path: one EUP transcendental + a few VPU ops + three row reductions.
    x = pred_ref[...].astype(jnp.float32)
    p = 0.5 * (jnp.tanh(0.5 * x) + 1.0)          # == sigmoid(x), single EUP op
    t = targ_ref[...].astype(jnp.float32)

    if mask_tail:
        # Ragged spatial tail: zero out-of-range lanes with a select so
        # unspecified OOB data (possible NaN/Inf) cannot reach the sums.
        col = jax.lax.broadcasted_iota(jnp.int32, p.shape, 1) + k * ts
        valid = col < s_valid
        p = jnp.where(valid, p, 0.0)
        t = jnp.where(valid, t, 0.0)

    pt_ref[...] += jnp.sum(p * t, axis=1, keepdims=True)
    p_ref[...] += jnp.sum(p, axis=1, keepdims=True)
    t_ref[...] += jnp.sum(t, axis=1, keepdims=True)

    @pl.when(k == pl.num_programs(1) - 1)
    def _():
        sum_pt = pt_ref[...]
        sum_p = p_ref[...]
        sum_t = t_ref[...]
        n = jnp.float32(s_valid)                 # real (unpadded) element count
        tp = sum_pt
        fp = sum_p - sum_pt
        fn = sum_t - sum_pt
        tn = n - sum_p - sum_t + sum_pt
        sensitivity = (tp + smooth) / (tp + fn + smooth)
        specificity = (tn + smooth) / (tn + fp + smooth)
        loss_ref[...] = (sens_w * (1.0 - sensitivity)
                         + spec_w * (1.0 - specificity))


def sensitivity_specificity_loss(predictions, targets,
                                 sensitivity_weight=1.0,
                                 specificity_weight=1.0,
                                 smooth=1e-6):
    """predictions/targets: (B, C, *spatial) (NCHW). Returns scalar f32 loss."""
    B, C = predictions.shape[0], predictions.shape[1]
    S = 1
    for d in predictions.shape[2:]:
        S *= d
    BC = B * C

    # Pure reshapes (contiguous) — no extra HBM pass, original dtypes kept.
    pred2d = predictions.reshape(BC, S)
    targ2d = targets.reshape(BC, S)

    pred_bytes = jnp.dtype(pred2d.dtype).itemsize
    targ_bytes = jnp.dtype(targ2d.dtype).itemsize

    # ---- tile-size selection (mem-bound: make blocks as big as VMEM allows) -
    vmem_cap = _vmem_capacity_bytes()
    vmem_limit = min(int(vmem_cap * 3 // 4), 100 * 1024 * 1024)
    budget = vmem_limit * 7 // 8                     # headroom for out/scratch
    bytes_per_elem_pipelined = (pred_bytes + targ_bytes) * 2   # double-buffered
    max_block_elems = max(_LANE * 8, budget // bytes_per_elem_pipelined)
    # ~2M elems on 128-MiB-VMEM parts (v5e/v6e), ~1M on 64-MiB parts (v7x).
    elem_cap = (2 << 20) if vmem_cap >= (96 << 20) else (1 << 20)
    block_elems = min(elem_cap, max_block_elems)

    TR = 8                                           # row-tile (multiple of 8)
    S128 = _round_up(S, _LANE)
    max_ts = max(_LANE, (block_elems // TR) // _LANE * _LANE)
    n_chunks0 = _cdiv(S128, max_ts)
    TS = _round_up(_cdiv(S128, n_chunks0), _LANE)    # lane-multiple chunk size
    n_chunks = _cdiv(S, TS)

    # Small spatial / many rows: grow the row tile, but keep >= 2 row tiles
    # whenever possible so v7x's second TensorCore has a parallel axis to take.
    while ((TR * 2) * TS <= block_elems
           and _cdiv(BC, TR * 2) >= 2):
        TR *= 2
    n_row_tiles = _cdiv(BC, TR)
    BC_out = n_row_tiles * TR                        # padded rows are discarded

    kernel = functools.partial(
        _ss_loss_kernel,
        smooth=float(smooth),
        sens_w=float(sensitivity_weight),
        spec_w=float(specificity_weight),
        s_valid=int(S),
        ts=int(TS),
        mask_tail=(S % TS != 0),
    )

    per_row = pl.pallas_call(
        kernel,
        out_shape=jax.ShapeDtypeStruct((BC_out, 1), jnp.float32),
        grid_spec=pltpu.PrefetchScalarGridSpec(
            num_scalar_prefetch=0,
            grid=(n_row_tiles, n_chunks),
            in_specs=[
                pl.BlockSpec((TR, TS), lambda r, k: (r, k)),
                pl.BlockSpec((TR, TS), lambda r, k: (r, k)),
            ],
            out_specs=pl.BlockSpec((TR, 1), lambda r, k: (r, 0)),
            scratch_shapes=[
                pltpu.VMEM((TR, 1), jnp.float32),   # sum(p*t)
                pltpu.VMEM((TR, 1), jnp.float32),   # sum(p)
                pltpu.VMEM((TR, 1), jnp.float32),   # sum(t)
            ],
        ),
        compiler_params=pltpu.CompilerParams(
            dimension_semantics=("parallel", "arbitrary"),
            vmem_limit_bytes=int(vmem_limit),
        ),
    )(pred2d, targ2d)

    return jnp.mean(per_row[:BC, 0])


def _reference(predictions, targets, sensitivity_weight=1.0,
               specificity_weight=1.0, smooth=1e-6):
    p = jax.nn.sigmoid(predictions).reshape(
        predictions.shape[0], predictions.shape[1], -1)
    t = targets.reshape(targets.shape[0], targets.shape[1], -1)
    tp = (p * t).sum(-1)
    tn = ((1 - p) * (1 - t)).sum(-1)
    fp = (p * (1 - t)).sum(-1)
    fn = ((1 - p) * t).sum(-1)
    sens = (tp + smooth) / (tp + fn + smooth)
    spec = (tn + smooth) / (tn + fp + smooth)
    return (sensitivity_weight * (1 - sens)
            + specificity_weight * (1 - spec)).mean()


if __name__ == "__main__":
    key = jax.random.PRNGKey(0)
    k1, k2, k3, k4, k5, k6 = jax.random.split(key, 6)

    # Test 1: aligned shapes (B, C, H, W) = (2, 4, 16, 16), binary targets.
    B, C, H, W = 2, 4, 16, 16
    predictions = jax.random.normal(k1, (B, C, H, W), dtype=jnp.float32)
    targets = (jax.random.uniform(k2, (B, C, H, W)) > 0.5).astype(jnp.float32)
    loss = jax.block_until_ready(sensitivity_specificity_loss(predictions, targets))
    ref = _reference(predictions, targets)
    assert jnp.allclose(loss, ref, rtol=1e-5, atol=1e-5), (loss, ref)

    # Test 2: ragged shapes exercising in-kernel tail masking + row overhang.
    B2, C2, H2, W2 = 1, 3, 9, 13
    predictions2 = jax.random.normal(k3, (B2, C2, H2, W2), dtype=jnp.float32)
    targets2 = (jax.random.uniform(k4, (B2, C2, H2, W2)) > 0.5).astype(jnp.float32)
    loss2 = jax.block_until_ready(sensitivity_specificity_loss(
        predictions2, targets2, sensitivity_weight=0.7, specificity_weight=1.3))
    ref2 = _reference(predictions2, targets2,
                      sensitivity_weight=0.7, specificity_weight=1.3)
    assert jnp.allclose(loss2, ref2, rtol=1e-5, atol=1e-5), (loss2, ref2)

    # Test 3: soft (non-binary) targets — exact now that no bf16 rounding occurs.
    predictions3 = jax.random.normal(k5, (B, C, H, W), dtype=jnp.float32)
    targets3 = jax.random.uniform(k6, (B, C, H, W), dtype=jnp.float32)
    loss3 = jax.block_until_ready(
        sensitivity_specificity_loss(predictions3, targets3))
    ref3 = _reference(predictions3, targets3)
    assert jnp.allclose(loss3, ref3, rtol=1e-5, atol=1e-5), (loss3, ref3)

    print("KERNEL_OK")
</pallas_src>

<mosaic_0001>
module attributes {stable_mosaic.version = 11 : i64} {
  func.func @_ss_loss_kernel(%arg0: i32, %arg1: i32, %arg2: memref<8x256xf32, #tpu.memory_space<vmem>>, %arg3: memref<8x256xf32, #tpu.memory_space<vmem>>, %arg4: memref<8x1xf32, #tpu.memory_space<vmem>>, %arg5: memref<8x1xf32, #tpu.memory_space<vmem>>, %arg6: memref<8x1xf32, #tpu.memory_space<vmem>>, %arg7: memref<8x1xf32, #tpu.memory_space<vmem>>) attributes {dimension_semantics = [#tpu.dimension_semantics<parallel>, #tpu.dimension_semantics<arbitrary>], iteration_bounds = array<i64: 1, 1>, scalar_prefetch = 0 : i64, scratch_operands = 3 : i64, tpu.core_type = #tpu.core_type<tc>, window_params = [{transform_indices = @transform_0, window_bounds = array<i64: 8, 256>}, {transform_indices = @transform_1, window_bounds = array<i64: 8, 256>}, {transform_indices = @transform_2, window_bounds = array<i64: 8, 1>}]} {
    %c0_i32 = arith.constant 0 : i32
    %0 = arith.cmpi eq, %arg1, %c0_i32 : i32
    %1 = arith.extui %0 : i1 to i32
    %c0_i32_0 = arith.constant 0 : i32
    %2 = arith.cmpi ne, %1, %c0_i32_0 : i32
    scf.if %2 {
      %cst_23 = arith.constant 0.000000e+00 : f32
      %31 = vector.broadcast %cst_23 : f32 to vector<8x1xf32>
      %c0_24 = arith.constant 0 : index
      %c0_25 = arith.constant 0 : index
      %32 = vector.load %arg5[%c0_24, %c0_25] : memref<8x1xf32, #tpu.memory_space<vmem>>, vector<8x1xf32>
      tpu.vector_store %arg5[%c0_24, %c0_25], %31 {strides = array<i32>} : memref<8x1xf32, #tpu.memory_space<vmem>>, vector<8x1xf32>,
      %cst_26 = arith.constant 0.000000e+00 : f32
      %33 = vector.broadcast %cst_26 : f32 to vector<8x1xf32>
      %c0_27 = arith.constant 0 : index
      %c0_28 = arith.constant 0 : index
      %34 = vector.load %arg6[%c0_27, %c0_28] : memref<8x1xf32, #tpu.memory_space<vmem>>, vector<8x1xf32>
      tpu.vector_store %arg6[%c0_27, %c0_28], %33 {strides = array<i32>} : memref<8x1xf32, #tpu.memory_space<vmem>>, vector<8x1xf32>,
      %cst_29 = arith.constant 0.000000e+00 : f32
      %35 = vector.broadcast %cst_29 : f32 to vector<8x1xf32>
      %c0_30 = arith.constant 0 : index
      %c0_31 = arith.constant 0 : index
      %36 = vector.load %arg7[%c0_30, %c0_31] : memref<8x1xf32, #tpu.memory_space<vmem>>, vector<8x1xf32>
      tpu.vector_store %arg7[%c0_30, %c0_31], %35 {strides = array<i32>} : memref<8x1xf32, #tpu.memory_space<vmem>>, vector<8x1xf32>,
    } else {
    }
    %c0 = arith.constant 0 : index
    %c0_1 = arith.constant 0 : index
    %3 = vector.load %arg2[%c0, %c0_1] : memref<8x256xf32, #tpu.memory_space<vmem>>, vector<8x256xf32>
    %cst = arith.constant 5.000000e-01 : f32
    %4 = vector.broadcast %cst : f32 to vector<8x256xf32>
    %5 = arith.mulf %4, %3 : vector<8x256xf32>
    %6 = math.tanh %5 : vector<8x256xf32>
    %cst_2 = arith.constant 1.000000e+00 : f32
    %7 = vector.broadcast %cst_2 : f32 to vector<8x256xf32>
    %8 = arith.addf %6, %7 : vector<8x256xf32>
    %cst_3 = arith.constant 5.000000e-01 : f32
    %9 = vector.broadcast %cst_3 : f32 to vector<8x256xf32>
    %10 = arith.mulf %9, %8 : vector<8x256xf32>
    %c0_4 = arith.constant 0 : index
    %c0_5 = arith.constant 0 : index
    %11 = vector.load %arg3[%c0_4, %c0_5] : memref<8x256xf32, #tpu.memory_space<vmem>>, vector<8x256xf32>
    %c0_6 = arith.constant 0 : index
    %c0_7 = arith.constant 0 : index
    %12 = vector.load %arg5[%c0_6, %c0_7] : memref<8x1xf32, #tpu.memory_space<vmem>>, vector<8x1xf32>
    %13 = arith.mulf %10, %11 : vector<8x256xf32>
    %cst_8 = arith.constant dense<0.000000e+00> : vector<8xf32>
    %14 = vector.multi_reduction <add>, %13, %cst_8 [1] : vector<8x256xf32> to vector<8xf32>
    %15 = vector.shape_cast %14 : vector<8xf32> to vector<8x1xf32>
    %16 = arith.addf %12, %15 : vector<8x1xf32>
    %c0_9 = arith.constant 0 : index
    %c0_10 = arith.constant 0 : index
    %17 = vector.load %arg5[%c0_9, %c0_10] : memref<8x1xf32, #tpu.memory_space<vmem>>, vector<8x1xf32>
    tpu.vector_store %arg5[%c0_9, %c0_10], %16 {strides = array<i32>} : memref<8x1xf32, #tpu.memory_space<vmem>>, vector<8x1xf32>,
    %c0_11 = arith.constant 0 : index
    %c0_12 = arith.constant 0 : index
    %18 = vector.load %arg6[%c0_11, %c0_12] : memref<8x1xf32, #tpu.memory_space<vmem>>, vector<8x1xf32>
    %cst_13 = arith.constant dense<0.000000e+00> : vector<8xf32>
    %19 = vector.multi_reduction <add>, %10, %cst_13 [1] : vector<8x256xf32> to vector<8xf32>
    %20 = vector.shape_cast %19 : vector<8xf32> to vector<8x1xf32>
    %21 = arith.addf %18, %20 : vector<8x1xf32>
    %c0_14 = arith.constant 0 : index
    %c0_15 = arith.constant 0 : index
    %22 = vector.load %arg6[%c0_14, %c0_15] : memref<8x1xf32, #tpu.memory_space<vmem>>, vector<8x1xf32>
    tpu.vector_store %arg6[%c0_14, %c0_15], %21 {strides = array<i32>} : memref<8x1xf32, #tpu.memory_space<vmem>>, vector<8x1xf32>,
    %c0_16 = arith.constant 0 : index
    %c0_17 = arith.constant 0 : index
    %23 = vector.load %arg7[%c0_16, %c0_17] : memref<8x1xf32, #tpu.memory_space<vmem>>, vector<8x1xf32>
    %cst_18 = arith.constant dense<0.000000e+00> : vector<8xf32>
    %24 = vector.multi_reduction <add>, %11, %cst_18 [1] : vector<8x256xf32> to vector<8xf32>
    %25 = vector.shape_cast %24 : vector<8xf32> to vector<8x1xf32>
    %26 = arith.addf %23, %25 : vector<8x1xf32>
    %c0_19 = arith.constant 0 : index
    %c0_20 = arith.constant 0 : index
    %27 = vector.load %arg7[%c0_19, %c0_20] : memref<8x1xf32, #tpu.memory_space<vmem>>, vector<8x1xf32>
    tpu.vector_store %arg7[%c0_19, %c0_20], %26 {strides = array<i32>} : memref<8x1xf32, #tpu.memory_space<vmem>>, vector<8x1xf32>,
    %c0_i32_21 = arith.constant 0 : i32
    %28 = arith.cmpi eq, %arg1, %c0_i32_21 : i32
    %29 = arith.extui %28 : i1 to i32
    %c0_i32_22 = arith.constant 0 : i32
    %30 = arith.cmpi ne, %29, %c0_i32_22 : i32
    scf.if %30 {
      %c0_23 = arith.constant 0 : index
      %c0_24 = arith.constant 0 : index
      %31 = vector.load %arg5[%c0_23, %c0_24] : memref<8x1xf32, #tpu.memory_space<vmem>>, vector<8x1xf32>
      %c0_25 = arith.constant 0 : index
      %c0_26 = arith.constant 0 : index
      %32 = vector.load %arg6[%c0_25, %c0_26] : memref<8x1xf32, #tpu.memory_space<vmem>>, vector<8x1xf32>
      %c0_27 = arith.constant 0 : index
      %c0_28 = arith.constant 0 : index
      %33 = vector.load %arg7[%c0_27, %c0_28] : memref<8x1xf32, #tpu.memory_space<vmem>>, vector<8x1xf32>
      %34 = arith.subf %32, %31 : vector<8x1xf32>
      %35 = arith.subf %33, %31 : vector<8x1xf32>
      %cst_29 = arith.constant 2.560000e+02 : f32
      %36 = vector.broadcast %cst_29 : f32 to vector<8x1xf32>
      %37 = arith.subf %36, %32 : vector<8x1xf32>
      %38 = arith.subf %37, %33 : vector<8x1xf32>
      %39 = arith.addf %38, %31 : vector<8x1xf32>
      %cst_30 = arith.constant 9.99999997E-7 : f32
      %40 = vector.broadcast %cst_30 : f32 to vector<8x1xf32>
      %41 = arith.addf %31, %40 : vector<8x1xf32>
      %42 = arith.addf %31, %35 : vector<8x1xf32>
      %cst_31 = arith.constant 9.99999997E-7 : f32
      %43 = vector.broadcast %cst_31 : f32 to vector<8x1xf32>
      %44 = arith.addf %42, %43 : vector<8x1xf32>
      %45 = arith.divf %41, %44 : vector<8x1xf32>
      %cst_32 = arith.constant 9.99999997E-7 : f32
      %46 = vector.broadcast %cst_32 : f32 to vector<8x1xf32>
      %47 = arith.addf %39, %46 : vector<8x1xf32>
      %48 = arith.addf %39, %34 : vector<8x1xf32>
      %cst_33 = arith.constant 9.99999997E-7 : f32
      %49 = vector.broadcast %cst_33 : f32 to vector<8x1xf32>
      %50 = arith.addf %48, %49 : vector<8x1xf32>
      %51 = arith.divf %47, %50 : vector<8x1xf32>
      %cst_34 = arith.constant 1.000000e+00 : f32
      %52 = vector.broadcast %cst_34 : f32 to vector<8x1xf32>
      %53 = arith.subf %52, %45 : vector<8x1xf32>
      %cst_35 = arith.constant 1.000000e+00 : f32
      %54 = vector.broadcast %cst_35 : f32 to vector<8x1xf32>
      %55 = arith.mulf %54, %53 : vector<8x1xf32>
      %cst_36 = arith.constant 1.000000e+00 : f32
      %56 = vector.broadcast %cst_36 : f32 to vector<8x1xf32>
      %57 = arith.subf %56, %51 : vector<8x1xf32>
      %cst_37 = arith.constant 1.000000e+00 : f32
      %58 = vector.broadcast %cst_37 : f32 to vector<8x1xf32>
      %59 = arith.mulf %58, %57 : vector<8x1xf32>
      %60 = arith.addf %55, %59 : vector<8x1xf32>
      %c0_38 = arith.constant 0 : index
      %c0_39 = arith.constant 0 : index
      %61 = vector.load %arg4[%c0_38, %c0_39] : memref<8x1xf32, #tpu.memory_space<vmem>>, vector<8x1xf32>
      tpu.vector_store %arg4[%c0_38, %c0_39], %60 {strides = array<i32>} : memref<8x1xf32, #tpu.memory_space<vmem>>, vector<8x1xf32>,
    } else {
    }
    return
  }
  func.func @transform_0(%arg0: i32, %arg1: i32) -> (i32, i32) {
    %c0_i32 = arith.constant 0 : i32
    return %arg0, %arg1 : i32, i32
  }
  func.func @transform_1(%arg0: i32, %arg1: i32) -> (i32, i32) {
    %c0_i32 = arith.constant 0 : i32
    return %arg0, %arg1 : i32, i32
  }
  func.func @transform_2(%arg0: i32, %arg1: i32) -> (i32, i32) {
    %c0_i32 = arith.constant 0 : i32
    %c0_i32_0 = arith.constant 0 : i32
    return %arg0, %c0_i32 : i32, i32
  }
}

</mosaic_0001>

<llo_original>
// kernel: tpu_custom_call.1
$region0: #{tpu_custom_call.1}
  #allocation0 [shape = 'u32[]', space=smem, size = 0x4, offset = 0x4, fixed_abs, tag = 'smem constant byte address 0x4 - core index']
  #allocation1 [shape = 'u32[144,128]{1,0:T(1,128)}', space=vmem, size = 0x12000, scoped, tag = 'internal scratch']
  #allocation2 [shape = 'f32[8,1]{1,0:T(8,128)}', space=vmem, size = 0x1000, scoped, tag = 'scratch operand']
  #allocation3 [shape = 'f32[8,1]{1,0:T(8,128)}', space=vmem, size = 0x1000, scoped, tag = 'scratch operand']
  #allocation4 [shape = 'f32[8,1]{1,0:T(8,128)}', space=vmem, size = 0x1000, scoped, tag = 'scratch operand']
  %s0 = inlined_call_operand.hbm [shape: f32[8,256], index: 0, kind: input, shape index: {}]
  %s1 = inlined_call_operand.hbm [shape: f32[8,256], index: 1, kind: input, shape index: {}]
  %s2 = inlined_call_operand.vmem [shape: f32[8,1], index: 2, kind: output, shape index: {}]
  %s3 = sld [smem:[#allocation0]]
  $region34: #{tpu_custom_call.1} parent=0
    _
  %s5 = ssub.s32 1, %s3
  %s6 = scalar_select 0, %s5, %s3
  $region1: #{tpu_custom_call.1} parent=0
    #allocation5 [shape = 'u8[8192]{0}', space=vmem, size = 0x2000, scoped, tag = 'input window, operand 0, single buffered']
    #allocation6 [shape = 's32[1]{0}', space=sflag, size = 0x4, scoped, tag = 'scoped memory for tpu_custom_call.1']
    #allocation7 [shape = 'u8[8192]{0}', space=vmem, size = 0x2000, scoped, tag = 'input window, operand 1, single buffered']
    #allocation8 [shape = 's32[1]{0}', space=sflag, size = 0x4, scoped, tag = 'scoped memory for tpu_custom_call.1']
    %7 = vsyncpa [#allocation6], 0
    %8 = vsyncpa [#allocation8], 0
    // Predicated region
    $region2: #{tpu_custom_call.1} parent=1 // pred_check
      _
    $region3: #{tpu_custom_call.1} parent=1 // pred_check_branch
      %10 = sbr.rel (0) target = $region5
    $region4: #{tpu_custom_call.1} parent=1 // pred_region
      %s12 = ssub.s32 256, 256
      %13 = vsyncadd [#allocation6], %s12
      %s15 = sshll.u32 [#allocation5], 4
      %s16 = int_to_ptr.vmem [resolvable:$true] %s15
      %18 = dma.hbm_to_vmem [thread:$0]  %s0, 256, %s16, [#allocation6]
    $region5: #{tpu_custom_call.1} parent=1 // pred_fallthru
      _
    // Predicated region
    $region6: #{tpu_custom_call.1} parent=1 // pred_check
      _
    $region7: #{tpu_custom_call.1} parent=1 // pred_check_branch
      %20 = sbr.rel (0) target = $region9
    $region8: #{tpu_custom_call.1} parent=1 // pred_region
      %s22 = ssub.s32 256, 256
      %23 = vsyncadd [#allocation8], %s22
      %s25 = sshll.u32 [#allocation7], 4
      %s26 = int_to_ptr.vmem [resolvable:$true] %s25
      %28 = dma.hbm_to_vmem [thread:$0]  %s1, 256, %s26, [#allocation8]
    $region9: #{tpu_custom_call.1} parent=1 // pred_fallthru
      _
    // Predicated region
    $region10: #{tpu_custom_call.1} parent=1 // pred_check
      _
    $region11: #{tpu_custom_call.1} parent=1 // pred_check_branch
      %30 = sbr.rel (0) target = $region13
    $region12: #{tpu_custom_call.1} parent=1 // pred_region
      %31 = dma.done [#allocation6], 256
    $region13: #{tpu_custom_call.1} parent=1 // pred_fallthru
      _
    // Predicated region
    $region14: #{tpu_custom_call.1} parent=1 // pred_check
      _
    $region15: #{tpu_custom_call.1} parent=1 // pred_check_branch
      %33 = sbr.rel (0) target = $region17
    $region16: #{tpu_custom_call.1} parent=1 // pred_region
      %34 = dma.done [#allocation8], 256
    $region17: #{tpu_custom_call.1} parent=1 // pred_fallthru
      _
    %p35 = scmp.eq.s32.totalorder 0, 0
    // Predicated region
    $region18: #{tpu_custom_call.1} parent=1 // pred_check
      %p36 = pneg %p35
    $region19: #{tpu_custom_call.1} parent=1 // pred_check_branch
      %38 = sbr.rel (%p36) target = $region21
    $region20: #{tpu_custom_call.1} parent=1 // pred_region
      %vm39 = vcmask 7168
      %40 = vst.msk [vmem:[#allocation2] sm:$0xff] %vm39, 0.0
      %41 = vst.msk [vmem:[#allocation3] sm:$0xff] %vm39, 0.0
      %42 = vst.msk [vmem:[#allocation4] sm:$0xff] %vm39, 0.0
    $region21: #{tpu_custom_call.1} parent=1 // pred_fallthru
      _
    %v43 = vld [vmem:[#allocation5] sm:$0xff]
    %v44 = vld [vmem:[#allocation5 + $0x8] sm:$0xff]
    %v45 = vmul.f32 %v43, 0.5
    %v46 = vmul.f32 %v44, 0.5
    %v47 = vtanh.pop %v45
    %v48 = vtanh.pop %v46
    %v49 = vadd.f32 %v47, 1.0
    %v50 = vadd.f32 %v48, 1.0
    %v51 = vmul.f32 %v49, 0.5
    %v52 = vmul.f32 %v50, 0.5
    %v53 = vld [vmem:[#allocation7] sm:$0xff]
    %v54 = vld [vmem:[#allocation7 + $0x8] sm:$0xff]
    %v55 = vld [vmem:[#allocation2] sm:$0xff]
    %v56 = vmul.f32 %v51, %v53
    %v57 = vmul.f32 %v52, %v54
    %v58 = vadd.f32 %v56, %v57
    %59 = vadd.xlane.f32.xlu0 %v58
    %v60 = vpop.xlane.xlu0 %59
    %v61 = vadd.f32 %v55, %v60
    %vm62 = vcmask 7168
    %63 = vst.msk [vmem:[#allocation2] sm:$0xff] %vm62, %v61
    %v64 = vld [vmem:[#allocation3] sm:$0xff]
    %v65 = vadd.f32 %v51, %v52
    %66 = vadd.xlane.f32.xlu0 %v65
    %v67 = vpop.xlane.xlu0 %66
    %v68 = vadd.f32 %v64, %v67
    %69 = vst.msk [vmem:[#allocation3] sm:$0xff] %vm62, %v68
    %v70 = vld [vmem:[#allocation4] sm:$0xff]
    %v71 = vadd.f32 %v53, %v54
    %72 = vadd.xlane.f32.xlu0 %v71
    %v73 = vpop.xlane.xlu0 %72
    %v74 = vadd.f32 %v70, %v73
    %75 = vst.msk [vmem:[#allocation4] sm:$0xff] %vm62, %v74
    // Predicated region
    $region22: #{tpu_custom_call.1} parent=1 // pred_check
      %p76 = pneg %p35
    $region23: #{tpu_custom_call.1} parent=1 // pred_check_branch
      %78 = sbr.rel (%p76) target = $region25
    $region24: #{tpu_custom_call.1} parent=1 // pred_region
      %v79 = vld [vmem:[#allocation2] sm:$0xff]
      %v80 = vld [vmem:[#allocation3] sm:$0xff]
      %v81 = vld [vmem:[#allocation4] sm:$0xff]
      %v82 = vsub.f32 %v80, %v79
      %v83 = vsub.f32 %v81, %v79
      %v84 = vsub.f32 256.0, %v80
      %v85 = vsub.f32 %v84, %v81
      %v86 = vadd.f32 %v85, %v79
      %v87 = vadd.f32 %v79, 1e-06
      %v88 = vadd.f32 %v79, %v83
      %v89 = vadd.f32 %v88, 1e-06
      %v90 = vrcp.pop %v89
      %v91 = vmul.f32 %v87, %v90
      %v92 = vadd.f32 %v86, 1e-06
      %v93 = vadd.f32 %v86, %v82
      %v94 = vadd.f32 %v93, 1e-06
      %v95 = vrcp.pop %v94
      %v96 = vmul.f32 %v92, %v95
      %v97 = vsub.f32 1.0, %v91
      %v98 = vsub.f32 1.0, %v96
      %v99 = vadd.f32 %v97, %v98
      %100 = vst.msk [vmem:[%s2] sm:$0xff] %vm62, %v99
    $region25: #{tpu_custom_call.1} parent=1 // pred_fallthru
      _
    // Predicated region
    $region26: #{tpu_custom_call.1} parent=1 // pred_check
      _
    $region27: #{tpu_custom_call.1} parent=1 // pred_check_branch
      %102 = sbr.rel (0) target = $region29
    $region28: #{tpu_custom_call.1} parent=1 // pred_region
      _
    $region29: #{tpu_custom_call.1} parent=1 // pred_fallthru
      _
    // Predicated region
    $region30: #{tpu_custom_call.1} parent=1 // pred_check
      _
    $region31: #{tpu_custom_call.1} parent=1 // pred_check_branch
      %104 = sbr.rel (0) target = $region33
    $region32: #{tpu_custom_call.1} parent=1 // pred_region
      _
    $region33: #{tpu_custom_call.1} parent=1 // pred_fallthru
      _
    %105 = vsyncpa [#allocation6], 1
    %106 = vsyncpa [#allocation8], 1

</llo_original>
